<compile_context>
chip_gen: v7x
topology: tpu7x:2x2x1
jax: 0.10.0
libtpu: 0.0.40
codegen_flags: <defaults>
</compile_context>

<pallas_src>
import functools

import jax
import jax.numpy as jnp
from jax.experimental import pallas as pl
from jax.experimental.pallas import tpu as pltpu

# MLP sizes from Net.__init__ (non-cifar path): [784] + [128]*3 + [10]
SIZES = [784, 128, 128, 128, 10]
# Lane-padded sizes used inside the kernel (multiples of 128).
PAD_IN = 896    # 784 -> 896 (zero-padded x columns / w1 rows)
PAD_OUT = 128   # 10  -> 128 (zero-padded w4 columns / b4; sliced in wrapper)


def mlp_forward_kernel(x_ref,
                       w1_ref, b1_ref,
                       w2_ref, b2_ref,
                       w3_ref, b3_ref,
                       w4_ref, b4_ref,
                       out_ref):
    """Fused 4-layer MLP forward: (Linear+ReLU) x3 -> Linear.

    All matmuls run on the MXU with float32 accumulation; the bias-add/ReLU
    epilogues stay in float32 on the VPU (cheap on v5e/v6e/v7x even when the
    matmul operands are bf16).
    """
    wdt = w2_ref.dtype  # matmul operand dtype (float32 or bfloat16)
    h = jnp.dot(x_ref[...], w1_ref[...],
                preferred_element_type=jnp.float32) + b1_ref[...]
    h = jnp.maximum(h, 0.0)
    h = jnp.dot(h.astype(wdt), w2_ref[...],
                preferred_element_type=jnp.float32) + b2_ref[...]
    h = jnp.maximum(h, 0.0)
    h = jnp.dot(h.astype(wdt), w3_ref[...],
                preferred_element_type=jnp.float32) + b3_ref[...]
    h = jnp.maximum(h, 0.0)
    out = jnp.dot(h.astype(wdt), w4_ref[...],
                  preferred_element_type=jnp.float32) + b4_ref[...]
    out_ref[...] = out.astype(out_ref.dtype)
    # TODO(synk): Net.forward's is_cifar column masking (fill -1e11 outside the
    # task's class range) is skipped because is_cifar is False for the MLP path.


def _round_up(n, m):
    return ((n + m - 1) // m) * m


@functools.partial(jax.jit, static_argnames=("tm", "use_bf16"))
def net_forward(x, params, *, tm=256, use_bf16=False):
    """Pallas-call wrapper. x: (B, 784) float32 -> (B, 10) float32.

    `tm` is the requested batch tile; it is capped so the 1-D grid has >= 2
    steps when the batch allows it (keeps both v7x TensorCores busy) and the
    batch is zero-padded up to a multiple of the tile (no hard assert).
    """
    B, n_in = x.shape
    assert n_in == SIZES[0]
    (w1, b1), (w2, b2), (w3, b3), (w4, b4) = params

    # --- choose batch tile (all Python ints at trace time) -------------------
    tile = min(tm, max(8, B // 2))      # keep >= 2 grid steps when possible
    tile = max(8, (tile // 8) * 8)      # sublane-aligned
    B_pad = _round_up(B, tile)

    # --- lane/sublane padding (cheap XLA pads, fused with the producer) ------
    x_p = jnp.pad(x, ((0, B_pad - B), (0, PAD_IN - SIZES[0])))
    w1_p = jnp.pad(w1, ((0, PAD_IN - SIZES[0]), (0, 0)))
    w4_p = jnp.pad(w4, ((0, 0), (0, PAD_OUT - SIZES[-1])))
    b4_p = jnp.pad(b4, ((0, 0), (0, PAD_OUT - SIZES[-1])))

    mm_dtype = jnp.bfloat16 if use_bf16 else jnp.float32
    x_p = x_p.astype(mm_dtype)
    w1_p, w2_c, w3_c, w4_p = (a.astype(mm_dtype) for a in (w1_p, w2, w3, w4_p))
    # Biases stay float32 (float32 bias/ReLU epilogue in the kernel).

    grid = (B_pad // tile,)

    def full_spec(shape):
        # Grid-invariant block: identical (0, ..., 0) index every step, so the
        # weights/biases are fetched once and stay resident in VMEM.
        return pl.BlockSpec(shape, lambda i: (0,) * len(shape))

    flops = 2 * B_pad * (PAD_IN * 128 + 128 * 128 + 128 * 128 + 128 * PAD_OUT)
    bytes_accessed = (
        int(x_p.size) * x_p.dtype.itemsize
        + B_pad * PAD_OUT * 4
        + sum(int(a.size) * a.dtype.itemsize
              for a in (w1_p, b1, w2_c, b2, w3_c, b3, w4_p, b4_p)))
    cost = pl.CostEstimate(flops=flops, transcendentals=0,
                           bytes_accessed=bytes_accessed)

    out_pad = pl.pallas_call(
        mlp_forward_kernel,
        out_shape=jax.ShapeDtypeStruct((B_pad, PAD_OUT), jnp.float32),
        grid_spec=pltpu.PrefetchScalarGridSpec(
            num_scalar_prefetch=0,
            grid=grid,
            in_specs=[
                pl.BlockSpec((tile, PAD_IN), lambda i: (i, 0)),   # x tile
                full_spec(w1_p.shape), full_spec(b1.shape),
                full_spec(w2_c.shape), full_spec(b2.shape),
                full_spec(w3_c.shape), full_spec(b3.shape),
                full_spec(w4_p.shape), full_spec(b4_p.shape),
            ],
            out_specs=pl.BlockSpec((tile, PAD_OUT), lambda i: (i, 0)),
        ),
        compiler_params=pltpu.CompilerParams(
            dimension_semantics=("parallel",)),
        cost_estimate=cost,
    )(x_p, w1_p, b1, w2_c, b2, w3_c, b3, w4_p, b4_p)

    # Strip the batch and lane padding (wrapper-side slice is free).
    return out_pad[:B, :SIZES[-1]]


def init_params(key):
    """Deterministic init matching torch.nn.Linear's default:
    U(-1/sqrt(fan_in), 1/sqrt(fan_in)) for both weight and bias.
    Weights stored as (in, out)."""
    params = []
    for i in range(len(SIZES) - 1):
        fan_in, fan_out = SIZES[i], SIZES[i + 1]
        key, kw, kb = jax.random.split(key, 3)
        bound = 1.0 / jnp.sqrt(jnp.float32(fan_in))
        w = jax.random.uniform(kw, (fan_in, fan_out), jnp.float32,
                               minval=-bound, maxval=bound)
        b = jax.random.uniform(kb, (1, fan_out), jnp.float32,
                               minval=-bound, maxval=bound)
        params.append((w, b))
    return params


def reference_forward(x, params):
    """Pure-JAX reference of the same forward pass (for correctness check)."""
    h = x
    for li, (w, b) in enumerate(params):
        h = h @ w + b
        if li < len(params) - 1:
            h = jnp.maximum(h, 0.0)
    return h


if __name__ == "__main__":
    key = jax.random.PRNGKey(0)
    key, kx1, kx2 = jax.random.split(key, 3)
    params = init_params(key)

    # Small batch (single-tile path).
    B1 = 8
    x1 = jax.random.normal(kx1, (B1, SIZES[0]), jnp.float32)
    out1 = jax.block_until_ready(net_forward(x1, params))
    ref1 = reference_forward(x1, params)
    assert out1.shape == (B1, SIZES[-1])
    assert jnp.allclose(out1, ref1, atol=1e-4, rtol=1e-4), "f32 mismatch"

    # Non-tile-multiple batch (exercises pad-and-slice + multi-step grid).
    B2 = 40
    x2 = jax.random.normal(kx2, (B2, SIZES[0]), jnp.float32)
    out2 = jax.block_until_ready(net_forward(x2, params, tm=16))
    ref2 = reference_forward(x2, params)
    assert out2.shape == (B2, SIZES[-1])
    assert jnp.allclose(out2, ref2, atol=1e-4, rtol=1e-4), "padded-batch mismatch"

    # bf16 matmul-operand path (v6e/v7x perf mode); looser tolerance.
    out3 = jax.block_until_ready(net_forward(x1, params, use_bf16=True))
    assert out3.shape == (B1, SIZES[-1])
    assert jnp.allclose(out3, ref1, atol=5e-2, rtol=5e-2), "bf16 mismatch"

    print("KERNEL_OK")
</pallas_src>

<mosaic_0001>
module attributes {stable_mosaic.version = 11 : i64} {
  func.func @mlp_forward_kernel(%arg0: i32, %arg1: memref<8x896xf32, #tpu.memory_space<vmem>>, %arg2: memref<896x128xf32, #tpu.memory_space<vmem>>, %arg3: memref<1x128xf32, #tpu.memory_space<vmem>>, %arg4: memref<128x128xf32, #tpu.memory_space<vmem>>, %arg5: memref<1x128xf32, #tpu.memory_space<vmem>>, %arg6: memref<128x128xf32, #tpu.memory_space<vmem>>, %arg7: memref<1x128xf32, #tpu.memory_space<vmem>>, %arg8: memref<128x128xf32, #tpu.memory_space<vmem>>, %arg9: memref<1x128xf32, #tpu.memory_space<vmem>>, %arg10: memref<8x128xf32, #tpu.memory_space<vmem>>) attributes {dimension_semantics = [#tpu.dimension_semantics<parallel>], iteration_bounds = array<i64: 1>, scalar_prefetch = 0 : i64, scratch_operands = 0 : i64, tpu.core_type = #tpu.core_type<tc>, window_params = [{transform_indices = @transform_0, window_bounds = array<i64: 8, 896>}, {pipeline_mode = #tpu.pipeline_mode<synchronous>, transform_indices = @transform_1, window_bounds = array<i64: 896, 128>}, {pipeline_mode = #tpu.pipeline_mode<synchronous>, transform_indices = @transform_2, window_bounds = array<i64: 1, 128>}, {pipeline_mode = #tpu.pipeline_mode<synchronous>, transform_indices = @transform_3, window_bounds = array<i64: 128, 128>}, {pipeline_mode = #tpu.pipeline_mode<synchronous>, transform_indices = @transform_4, window_bounds = array<i64: 1, 128>}, {pipeline_mode = #tpu.pipeline_mode<synchronous>, transform_indices = @transform_5, window_bounds = array<i64: 128, 128>}, {pipeline_mode = #tpu.pipeline_mode<synchronous>, transform_indices = @transform_6, window_bounds = array<i64: 1, 128>}, {pipeline_mode = #tpu.pipeline_mode<synchronous>, transform_indices = @transform_7, window_bounds = array<i64: 128, 128>}, {pipeline_mode = #tpu.pipeline_mode<synchronous>, transform_indices = @transform_8, window_bounds = array<i64: 1, 128>}, {transform_indices = @transform_9, window_bounds = array<i64: 8, 128>}]} {
    %c0 = arith.constant 0 : index
    %c0_0 = arith.constant 0 : index
    %0 = vector.load %arg1[%c0, %c0_0] : memref<8x896xf32, #tpu.memory_space<vmem>>, vector<8x896xf32>
    %c0_1 = arith.constant 0 : index
    %c0_2 = arith.constant 0 : index
    %1 = vector.load %arg2[%c0_1, %c0_2] : memref<896x128xf32, #tpu.memory_space<vmem>>, vector<896x128xf32>
    %cst = arith.constant dense<0.000000e+00> : vector<8x128xf32>
    %2 = tpu.matmul %0, %1, %cst {dimension_numbers = #tpu.dot_dimension_numbers<[1], [0], [0], [1], [0, 0, 1, 1], [], []>} : vector<8x896xf32>, vector<896x128xf32>, vector<8x128xf32> -> vector<8x128xf32>
    %c0_3 = arith.constant 0 : index
    %c0_4 = arith.constant 0 : index
    %3 = vector.load %arg3[%c0_3, %c0_4] : memref<1x128xf32, #tpu.memory_space<vmem>>, vector<1x128xf32>
    %4 = vector.broadcast %3 : vector<1x128xf32> to vector<8x128xf32>
    %5 = arith.addf %2, %4 : vector<8x128xf32>
    %cst_5 = arith.constant 0.000000e+00 : f32
    %6 = vector.broadcast %cst_5 : f32 to vector<8x128xf32>
    %7 = arith.maximumf %5, %6 : vector<8x128xf32>
    %c0_6 = arith.constant 0 : index
    %c0_7 = arith.constant 0 : index
    %8 = vector.load %arg4[%c0_6, %c0_7] : memref<128x128xf32, #tpu.memory_space<vmem>>, vector<128x128xf32>
    %cst_8 = arith.constant dense<0.000000e+00> : vector<8x128xf32>
    %9 = tpu.matmul %7, %8, %cst_8 {dimension_numbers = #tpu.dot_dimension_numbers<[1], [0], [0], [1], [0, 0, 1, 1], [], []>} : vector<8x128xf32>, vector<128x128xf32>, vector<8x128xf32> -> vector<8x128xf32>
    %c0_9 = arith.constant 0 : index
    %c0_10 = arith.constant 0 : index
    %10 = vector.load %arg5[%c0_9, %c0_10] : memref<1x128xf32, #tpu.memory_space<vmem>>, vector<1x128xf32>
    %11 = vector.broadcast %10 : vector<1x128xf32> to vector<8x128xf32>
    %12 = arith.addf %9, %11 : vector<8x128xf32>
    %cst_11 = arith.constant 0.000000e+00 : f32
    %13 = vector.broadcast %cst_11 : f32 to vector<8x128xf32>
    %14 = arith.maximumf %12, %13 : vector<8x128xf32>
    %c0_12 = arith.constant 0 : index
    %c0_13 = arith.constant 0 : index
    %15 = vector.load %arg6[%c0_12, %c0_13] : memref<128x128xf32, #tpu.memory_space<vmem>>, vector<128x128xf32>
    %cst_14 = arith.constant dense<0.000000e+00> : vector<8x128xf32>
    %16 = tpu.matmul %14, %15, %cst_14 {dimension_numbers = #tpu.dot_dimension_numbers<[1], [0], [0], [1], [0, 0, 1, 1], [], []>} : vector<8x128xf32>, vector<128x128xf32>, vector<8x128xf32> -> vector<8x128xf32>
    %c0_15 = arith.constant 0 : index
    %c0_16 = arith.constant 0 : index
    %17 = vector.load %arg7[%c0_15, %c0_16] : memref<1x128xf32, #tpu.memory_space<vmem>>, vector<1x128xf32>
    %18 = vector.broadcast %17 : vector<1x128xf32> to vector<8x128xf32>
    %19 = arith.addf %16, %18 : vector<8x128xf32>
    %cst_17 = arith.constant 0.000000e+00 : f32
    %20 = vector.broadcast %cst_17 : f32 to vector<8x128xf32>
    %21 = arith.maximumf %19, %20 : vector<8x128xf32>
    %c0_18 = arith.constant 0 : index
    %c0_19 = arith.constant 0 : index
    %22 = vector.load %arg8[%c0_18, %c0_19] : memref<128x128xf32, #tpu.memory_space<vmem>>, vector<128x128xf32>
    %cst_20 = arith.constant dense<0.000000e+00> : vector<8x128xf32>
    %23 = tpu.matmul %21, %22, %cst_20 {dimension_numbers = #tpu.dot_dimension_numbers<[1], [0], [0], [1], [0, 0, 1, 1], [], []>} : vector<8x128xf32>, vector<128x128xf32>, vector<8x128xf32> -> vector<8x128xf32>
    %c0_21 = arith.constant 0 : index
    %c0_22 = arith.constant 0 : index
    %24 = vector.load %arg9[%c0_21, %c0_22] : memref<1x128xf32, #tpu.memory_space<vmem>>, vector<1x128xf32>
    %25 = vector.broadcast %24 : vector<1x128xf32> to vector<8x128xf32>
    %26 = arith.addf %23, %25 : vector<8x128xf32>
    %c0_23 = arith.constant 0 : index
    %c0_24 = arith.constant 0 : index
    %27 = vector.load %arg10[%c0_23, %c0_24] : memref<8x128xf32, #tpu.memory_space<vmem>>, vector<8x128xf32>
    tpu.vector_store %arg10[%c0_23, %c0_24], %26 {strides = array<i32>} : memref<8x128xf32, #tpu.memory_space<vmem>>, vector<8x128xf32>,
    return
  }
  func.func @transform_0(%arg0: i32) -> (i32, i32) {
    %c0_i32 = arith.constant 0 : i32
    %c0_i32_0 = arith.constant 0 : i32
    return %arg0, %c0_i32 : i32, i32
  }
  func.func @transform_1(%arg0: i32) -> (i32, i32) {
    %c0_i32 = arith.constant 0 : i32
    %c0_i32_0 = arith.constant 0 : i32
    %c0_i32_1 = arith.constant 0 : i32
    return %c0_i32, %c0_i32_0 : i32, i32
  }
  func.func @transform_2(%arg0: i32) -> (i32, i32) {
    %c0_i32 = arith.constant 0 : i32
    %c0_i32_0 = arith.constant 0 : i32
    %c0_i32_1 = arith.constant 0 : i32
    return %c0_i32, %c0_i32_0 : i32, i32
  }
  func.func @transform_3(%arg0: i32) -> (i32, i32) {
    %c0_i32 = arith.constant 0 : i32
    %c0_i32_0 = arith.constant 0 : i32
    %c0_i32_1 = arith.constant 0 : i32
    return %c0_i32, %c0_i32_0 : i32, i32
  }
  func.func @transform_4(%arg0: i32) -> (i32, i32) {
    %c0_i32 = arith.constant 0 : i32
    %c0_i32_0 = arith.constant 0 : i32
    %c0_i32_1 = arith.constant 0 : i32
    return %c0_i32, %c0_i32_0 : i32, i32
  }
  func.func @transform_5(%arg0: i32) -> (i32, i32) {
    %c0_i32 = arith.constant 0 : i32
    %c0_i32_0 = arith.constant 0 : i32
    %c0_i32_1 = arith.constant 0 : i32
    return %c0_i32, %c0_i32_0 : i32, i32
  }
  func.func @transform_6(%arg0: i32) -> (i32, i32) {
    %c0_i32 = arith.constant 0 : i32
    %c0_i32_0 = arith.constant 0 : i32
    %c0_i32_1 = arith.constant 0 : i32
    return %c0_i32, %c0_i32_0 : i32, i32
  }
  func.func @transform_7(%arg0: i32) -> (i32, i32) {
    %c0_i32 = arith.constant 0 : i32
    %c0_i32_0 = arith.constant 0 : i32
    %c0_i32_1 = arith.constant 0 : i32
    return %c0_i32, %c0_i32_0 : i32, i32
  }
  func.func @transform_8(%arg0: i32) -> (i32, i32) {
    %c0_i32 = arith.constant 0 : i32
    %c0_i32_0 = arith.constant 0 : i32
    %c0_i32_1 = arith.constant 0 : i32
    return %c0_i32, %c0_i32_0 : i32, i32
  }
  func.func @transform_9(%arg0: i32) -> (i32, i32) {
    %c0_i32 = arith.constant 0 : i32
    %c0_i32_0 = arith.constant 0 : i32
    return %arg0, %c0_i32 : i32, i32
  }
}

</mosaic_0001>

<llo_original>
// kernel: net_forward.1
$region0: #{net_forward.1}
  #allocation0 [shape = 'u32[]', space=smem, size = 0x4, offset = 0x4, fixed_abs, tag = 'smem constant byte address 0x4 - core index']
  #allocation1 [shape = 'u32[144,128]{1,0:T(1,128)}', space=vmem, size = 0x12000, scoped, tag = 'internal scratch']
  %s0 = inlined_call_operand.vmem [shape: f32[8,896], index: 0, kind: input, shape index: {}]
  %s1 = inlined_call_operand.vmem [shape: f32[896,128], index: 1, kind: input, shape index: {}]
  %s2 = inlined_call_operand.vmem [shape: f32[1,128], index: 2, kind: input, shape index: {}]
  %s3 = inlined_call_operand.vmem [shape: f32[128,128], index: 3, kind: input, shape index: {}]
  %s4 = inlined_call_operand.vmem [shape: f32[1,128], index: 4, kind: input, shape index: {}]
  %s5 = inlined_call_operand.vmem [shape: f32[128,128], index: 5, kind: input, shape index: {}]
  %s6 = inlined_call_operand.vmem [shape: f32[1,128], index: 6, kind: input, shape index: {}]
  %s7 = inlined_call_operand.vmem [shape: f32[128,128], index: 7, kind: input, shape index: {}]
  %s8 = inlined_call_operand.vmem [shape: f32[1,128], index: 8, kind: input, shape index: {}]
  %s9 = inlined_call_operand.hbm [shape: f32[8,128], index: 9, kind: output, shape index: {}]
  %s10 = sld [smem:[#allocation0]]
  $region46: #{net_forward.1} parent=0
    _
  %s12 = ssub.s32 1, %s10
  %s13 = scalar_select 0, %s12, %s10
  $region1: #{net_forward.1} parent=0
    #allocation2 [shape = 'u8[4096]{0}', space=vmem, size = 0x1000, scoped, tag = 'output window, operand 0, single buffered']
    #allocation3 [shape = 's32[1]{0}', space=sflag, size = 0x4, scoped, tag = 'scoped memory for net_forward.1']
    %14 = vsyncpa [#allocation3], 0
    // Predicated region
    $region2: #{net_forward.1} parent=1 // pred_check
      _
    $region3: #{net_forward.1} parent=1 // pred_check_branch
      %16 = sbr.rel (0) target = $region5
    $region4: #{net_forward.1} parent=1 // pred_region
      _
    $region5: #{net_forward.1} parent=1 // pred_fallthru
      _
    // Predicated region
    $region6: #{net_forward.1} parent=1 // pred_check
      _
    $region7: #{net_forward.1} parent=1 // pred_check_branch
      %18 = sbr.rel (0) target = $region9
    $region8: #{net_forward.1} parent=1 // pred_region
      _
    $region9: #{net_forward.1} parent=1 // pred_fallthru
      _
    // Predicated region
    $region10: #{net_forward.1} parent=1 // pred_check
      _
    $region11: #{net_forward.1} parent=1 // pred_check_branch
      %20 = sbr.rel (0) target = $region13
    $region12: #{net_forward.1} parent=1 // pred_region
      _
    $region13: #{net_forward.1} parent=1 // pred_fallthru
      _
    // Predicated region
    $region14: #{net_forward.1} parent=1 // pred_check
      _
    $region15: #{net_forward.1} parent=1 // pred_check_branch
      %22 = sbr.rel (0) target = $region17
    $region16: #{net_forward.1} parent=1 // pred_region
      _
    $region17: #{net_forward.1} parent=1 // pred_fallthru
      _
    // Predicated region
    $region18: #{net_forward.1} parent=1 // pred_check
      _
    $region19: #{net_forward.1} parent=1 // pred_check_branch
      %24 = sbr.rel (0) target = $region21
    $region20: #{net_forward.1} parent=1 // pred_region
      _
    $region21: #{net_forward.1} parent=1 // pred_fallthru
      _
    // Predicated region
    $region22: #{net_forward.1} parent=1 // pred_check
      _
    $region23: #{net_forward.1} parent=1 // pred_check_branch
      %26 = sbr.rel (0) target = $region25
    $region24: #{net_forward.1} parent=1 // pred_region
      _
    $region25: #{net_forward.1} parent=1 // pred_fallthru
      _
    // Predicated region
    $region26: #{net_forward.1} parent=1 // pred_check
      _
    $region27: #{net_forward.1} parent=1 // pred_check_branch
      %28 = sbr.rel (0) target = $region29
    $region28: #{net_forward.1} parent=1 // pred_region
      _
    $region29: #{net_forward.1} parent=1 // pred_fallthru
      _
    // Predicated region
    $region30: #{net_forward.1} parent=1 // pred_check
      _
    $region31: #{net_forward.1} parent=1 // pred_check_branch
      %30 = sbr.rel (0) target = $region33
    $region32: #{net_forward.1} parent=1 // pred_region
      _
    $region33: #{net_forward.1} parent=1 // pred_fallthru
      _
    // Predicated region
    $region34: #{net_forward.1} parent=1 // pred_check
      _
    $region35: #{net_forward.1} parent=1 // pred_check_branch
      %32 = sbr.rel (0) target = $region37
    $region36: #{net_forward.1} parent=1 // pred_region
      _
    $region37: #{net_forward.1} parent=1 // pred_fallthru
      _
    %v33 = vld [vmem:[%s0] sm:$0xff]
    %v34 = vld [vmem:[%s0 + $0x8] sm:$0xff]
    %v35 = vld [vmem:[%s0 + $0x10] sm:$0xff]
    %v36 = vld [vmem:[%s0 + $0x18] sm:$0xff]
    %v37 = vld [vmem:[%s0 + $0x20] sm:$0xff]
    %v38 = vld [vmem:[%s0 + $0x28] sm:$0xff]
    %v39 = vld [vmem:[%s0 + $0x30] sm:$0xff]
    %v40 = vld [vmem:[%s1] sm:$0xff]
    %v41 = vld [vmem:[%s1 + $0x8] sm:$0xff]
    %v42 = vld [vmem:[%s1 + $0x10] sm:$0xff]
    %v43 = vld [vmem:[%s1 + $0x18] sm:$0xff]
    %v44 = vld [vmem:[%s1 + $0x20] sm:$0xff]
    %v45 = vld [vmem:[%s1 + $0x28] sm:$0xff]
    %v46 = vld [vmem:[%s1 + $0x30] sm:$0xff]
    %v47 = vld [vmem:[%s1 + $0x38] sm:$0xff]
    %v48 = vld [vmem:[%s1 + $0x40] sm:$0xff]
    %v49 = vld [vmem:[%s1 + $0x48] sm:$0xff]
    %v50 = vld [vmem:[%s1 + $0x50] sm:$0xff]
    %v51 = vld [vmem:[%s1 + $0x58] sm:$0xff]
    %v52 = vld [vmem:[%s1 + $0x60] sm:$0xff]
    %v53 = vld [vmem:[%s1 + $0x68] sm:$0xff]
    %v54 = vld [vmem:[%s1 + $0x70] sm:$0xff]
    %v55 = vld [vmem:[%s1 + $0x78] sm:$0xff]
    %v56 = vld [vmem:[%s1 + $0x80] sm:$0xff]
    %v57 = vld [vmem:[%s1 + $0x88] sm:$0xff]
    %v58 = vld [vmem:[%s1 + $0x90] sm:$0xff]
    %v59 = vld [vmem:[%s1 + $0x98] sm:$0xff]
    %v60 = vld [vmem:[%s1 + $0xa0] sm:$0xff]
    %v61 = vld [vmem:[%s1 + $0xa8] sm:$0xff]
    %v62 = vld [vmem:[%s1 + $0xb0] sm:$0xff]
    %v63 = vld [vmem:[%s1 + $0xb8] sm:$0xff]
    %v64 = vld [vmem:[%s1 + $0xc0] sm:$0xff]
    %v65 = vld [vmem:[%s1 + $0xc8] sm:$0xff]
    %v66 = vld [vmem:[%s1 + $0xd0] sm:$0xff]
    %v67 = vld [vmem:[%s1 + $0xd8] sm:$0xff]
    %v68 = vld [vmem:[%s1 + $0xe0] sm:$0xff]
    %v69 = vld [vmem:[%s1 + $0xe8] sm:$0xff]
    %v70 = vld [vmem:[%s1 + $0xf0] sm:$0xff]
    %v71 = vld [vmem:[%s1 + $0xf8] sm:$0xff]
    %v72 = vld [vmem:[%s1 + $0x100] sm:$0xff]
    %v73 = vld [vmem:[%s1 + $0x108] sm:$0xff]
    %v74 = vld [vmem:[%s1 + $0x110] sm:$0xff]
    %v75 = vld [vmem:[%s1 + $0x118] sm:$0xff]
    %v76 = vld [vmem:[%s1 + $0x120] sm:$0xff]
    %v77 = vld [vmem:[%s1 + $0x128] sm:$0xff]
    %v78 = vld [vmem:[%s1 + $0x130] sm:$0xff]
    %v79 = vld [vmem:[%s1 + $0x138] sm:$0xff]
    %v80 = vld [vmem:[%s1 + $0x140] sm:$0xff]
    %v81 = vld [vmem:[%s1 + $0x148] sm:$0xff]
    %v82 = vld [vmem:[%s1 + $0x150] sm:$0xff]
    %v83 = vld [vmem:[%s1 + $0x158] sm:$0xff]
    %v84 = vld [vmem:[%s1 + $0x160] sm:$0xff]
    %v85 = vld [vmem:[%s1 + $0x168] sm:$0xff]
    %v86 = vld [vmem:[%s1 + $0x170] sm:$0xff]
    %v87 = vld [vmem:[%s1 + $0x178] sm:$0xff]
    %v88 = vld [vmem:[%s1 + $0x180] sm:$0xff]
    %v89 = vld [vmem:[%s1 + $0x188] sm:$0xff]
    %v90 = vld [vmem:[%s1 + $0x190] sm:$0xff]
    %v91 = vld [vmem:[%s1 + $0x198] sm:$0xff]
    %v92 = vld [vmem:[%s1 + $0x1a0] sm:$0xff]
    %v93 = vld [vmem:[%s1 + $0x1a8] sm:$0xff]
    %v94 = vld [vmem:[%s1 + $0x1b0] sm:$0xff]
    %v95 = vld [vmem:[%s1 + $0x1b8] sm:$0xff]
    %v96 = vld [vmem:[%s1 + $0x1c0] sm:$0xff]
    %v97 = vld [vmem:[%s1 + $0x1c8] sm:$0xff]
    %v98 = vld [vmem:[%s1 + $0x1d0] sm:$0xff]
    %v99 = vld [vmem:[%s1 + $0x1d8] sm:$0xff]
    %v100 = vld [vmem:[%s1 + $0x1e0] sm:$0xff]
    %v101 = vld [vmem:[%s1 + $0x1e8] sm:$0xff]
    %v102 = vld [vmem:[%s1 + $0x1f0] sm:$0xff]
    %v103 = vld [vmem:[%s1 + $0x1f8] sm:$0xff]
    %v104 = vld [vmem:[%s1 + $0x200] sm:$0xff]
    %v105 = vld [vmem:[%s1 + $0x208] sm:$0xff]
    %v106 = vld [vmem:[%s1 + $0x210] sm:$0xff]
    %v107 = vld [vmem:[%s1 + $0x218] sm:$0xff]
    %v108 = vld [vmem:[%s1 + $0x220] sm:$0xff]
    %v109 = vld [vmem:[%s1 + $0x228] sm:$0xff]
    %v110 = vld [vmem:[%s1 + $0x230] sm:$0xff]
    %v111 = vld [vmem:[%s1 + $0x238] sm:$0xff]
    %v112 = vld [vmem:[%s1 + $0x240] sm:$0xff]
    %v113 = vld [vmem:[%s1 + $0x248] sm:$0xff]
    %v114 = vld [vmem:[%s1 + $0x250] sm:$0xff]
    %v115 = vld [vmem:[%s1 + $0x258] sm:$0xff]
    %v116 = vld [vmem:[%s1 + $0x260] sm:$0xff]
    %v117 = vld [vmem:[%s1 + $0x268] sm:$0xff]
    %v118 = vld [vmem:[%s1 + $0x270] sm:$0xff]
    %v119 = vld [vmem:[%s1 + $0x278] sm:$0xff]
    %v120 = vld [vmem:[%s1 + $0x280] sm:$0xff]
    %v121 = vld [vmem:[%s1 + $0x288] sm:$0xff]
    %v122 = vld [vmem:[%s1 + $0x290] sm:$0xff]
    %v123 = vld [vmem:[%s1 + $0x298] sm:$0xff]
    %v124 = vld [vmem:[%s1 + $0x2a0] sm:$0xff]
    %v125 = vld [vmem:[%s1 + $0x2a8] sm:$0xff]
    %v126 = vld [vmem:[%s1 + $0x2b0] sm:$0xff]
    %v127 = vld [vmem:[%s1 + $0x2b8] sm:$0xff]
    %v128 = vld [vmem:[%s1 + $0x2c0] sm:$0xff]
    %v129 = vld [vmem:[%s1 + $0x2c8] sm:$0xff]
    %v130 = vld [vmem:[%s1 + $0x2d0] sm:$0xff]
    %v131 = vld [vmem:[%s1 + $0x2d8] sm:$0xff]
    %v132 = vld [vmem:[%s1 + $0x2e0] sm:$0xff]
    %v133 = vld [vmem:[%s1 + $0x2e8] sm:$0xff]
    %v134 = vld [vmem:[%s1 + $0x2f0] sm:$0xff]
    %v135 = vld [vmem:[%s1 + $0x2f8] sm:$0xff]
    %v136 = vld [vmem:[%s1 + $0x300] sm:$0xff]
    %v137 = vld [vmem:[%s1 + $0x308] sm:$0xff]
    %v138 = vld [vmem:[%s1 + $0x310] sm:$0xff]
    %v139 = vld [vmem:[%s1 + $0x318] sm:$0xff]
    %v140 = vld [vmem:[%s1 + $0x320] sm:$0xff]
    %v141 = vld [vmem:[%s1 + $0x328] sm:$0xff]
    %v142 = vld [vmem:[%s1 + $0x330] sm:$0xff]
    %v143 = vld [vmem:[%s1 + $0x338] sm:$0xff]
    %v144 = vld [vmem:[%s1 + $0x340] sm:$0xff]
    %v145 = vld [vmem:[%s1 + $0x348] sm:$0xff]
    %v146 = vld [vmem:[%s1 + $0x350] sm:$0xff]
    %v147 = vld [vmem:[%s1 + $0x358] sm:$0xff]
    %v148 = vld [vmem:[%s1 + $0x360] sm:$0xff]
    %v149 = vld [vmem:[%s1 + $0x368] sm:$0xff]
    %v150 = vld [vmem:[%s1 + $0x370] sm:$0xff]
    %v151 = vld [vmem:[%s1 + $0x378] sm:$0xff]
    %v152 = vld [vmem:[%s2] sm:$0x1]
    %v154 = vlaneseq
    %v155 = vshrl.u32 %v154, 7
    %v156 = vsub.s32 0, %v155
    %v157 = vrot.slane %v152, %v156
    %159 = vmatprep.subr.mxu0 0.0
    %160 = vmatpush1.msra.mxu0 %v40
    %161 = vmatprep.subr.mxu0 0.0
    %162 = vmatpush1.msra.mxu0 %v41
    %163 = vmatprep.subr.mxu0 0.0
    %164 = vmatpush1.msra.mxu0 %v42
    %165 = vmatprep.subr.mxu0 0.0
    %166 = vmatpush1.msra.mxu0 %v43
    %167 = vmatprep.subr.mxu0 0.0
    %168 = vmatpush1.msra.mxu0 %v44
    %169 = vmatprep.subr.mxu0 0.0
    %170 = vmatpush1.msra.mxu0 %v45
    %171 = vmatprep.subr.mxu0 0.0
    %172 = vmatpush1.msra.mxu0 %v46
    %173 = vmatprep.subr.mxu0 0.0
    %174 = vmatpush1.msra.mxu0 %v47
    %175 = vmatprep.subr.mxu0 0.0
    %176 = vmatpush1.msra.mxu0 %v48
    %177 = vmatprep.subr.mxu0 0.0
    %178 = vmatpush1.msra.mxu0 %v49
    %179 = vmatprep.subr.mxu0 0.0
    %180 = vmatpush1.msra.mxu0 %v50
    %181 = vmatprep.subr.mxu0 0.0
    %182 = vmatpush1.msra.mxu0 %v51
    %183 = vmatprep.subr.mxu0 0.0
    %184 = vmatpush1.msra.mxu0 %v52
    %185 = vmatprep.subr.mxu0 0.0
    %186 = vmatpush1.msra.mxu0 %v53
    %187 = vmatprep.subr.mxu0 0.0
    %188 = vmatpush1.msra.mxu0 %v54
    %189 = vmatprep.subr.mxu0 0.0
    %190 = vmatpush1.msra.mxu0 %v55
    %191 = vmatprep.subr.mxu0 0.0
    %192 = vmatpush1.msra.mxu0 %v56
    %193 = vmatprep.subr.mxu0 0.0
    %194 = vmatpush1.msra.mxu0 %v57
    %195 = vmatprep.subr.mxu0 0.0
    %196 = vmatpush1.msra.mxu0 %v58
    %197 = vmatprep.subr.mxu0 0.0
    %198 = vmatpush1.msra.mxu0 %v59
    %199 = vmatprep.subr.mxu0 0.0
    %200 = vmatpush1.msra.mxu0 %v60
    %201 = vmatprep.subr.mxu0 0.0
    %202 = vmatpush1.msra.mxu0 %v61
    %203 = vmatprep.subr.mxu0 0.0
    %204 = vmatpush1.msra.mxu0 %v62
    %205 = vmatprep.subr.mxu0 0.0
    %206 = vmatpush1.msra.mxu0 %v63
    %207 = vmatprep.subr.mxu0 0.0
    %208 = vmatpush1.msra.mxu0 %v64
    %209 = vmatprep.subr.mxu0 0.0
    %210 = vmatpush1.msra.mxu0 %v65
    %211 = vmatprep.subr.mxu0 0.0
    %212 = vmatpush1.msra.mxu0 %v66
    %213 = vmatprep.subr.mxu0 0.0
    %214 = vmatpush1.msra.mxu0 %v67
    %215 = vmatprep.subr.mxu0 0.0
    %216 = vmatpush1.msra.mxu0 %v68
    %217 = vmatprep.subr.mxu0 0.0
    %218 = vmatpush1.msra.mxu0 %v69
    %219 = vmatprep.subr.mxu0 0.0
    %220 = vmatpush1.msra.mxu0 %v70
    %221 = vmatprep.subr.mxu0 0.0
    %222 = vmatpush1.msra.mxu0 %v71
    %223 = vmatprep.mubr.f32.mxu0 %v34
    %224 = vmatmul.mubr.f32.gmra.mrb[0].mxu0 %v33
    %v225 = vpop.f32.mrb[0].mxu0
    %v226 = vadd.f32 %v157, %v225
    %v227 = vpop.f32.mrb[0].mxu0
    %228 = vdwg.mxu0
    %229 = vmatprep.subr.mxu0 0.0
    %230 = vmatpush1.msra.mxu0 %v72
    %231 = vmatprep.subr.mxu0 0.0
    %232 = vmatpush1.msra.mxu0 %v73
    %233 = vmatprep.subr.mxu0 0.0
    %234 = vmatpush1.msra.mxu0 %v74
    %235 = vmatprep.subr.mxu0 0.0
    %236 = vmatpush1.msra.mxu0 %v75
    %237 = vmatprep.subr.mxu0 0.0
    %238 = vmatpush1.msra.mxu0 %v76
    %239 = vmatprep.subr.mxu0 0.0
    %240 = vmatpush1.msra.mxu0 %v77
    %241 = vmatprep.subr.mxu0 0.0
    %242 = vmatpush1.msra.mxu0 %v78
    %243 = vmatprep.subr.mxu0 0.0
    %244 = vmatpush1.msra.mxu0 %v79
    %245 = vmatprep.subr.mxu0 0.0
    %246 = vmatpush1.msra.mxu0 %v80
    %247 = vmatprep.subr.mxu0 0.0
    %248 = vmatpush1.msra.mxu0 %v81
    %249 = vmatprep.subr.mxu0 0.0
    %250 = vmatpush1.msra.mxu0 %v82
    %251 = vmatprep.subr.mxu0 0.0
    %252 = vmatpush1.msra.mxu0 %v83
    %253 = vmatprep.subr.mxu0 0.0
    %254 = vmatpush1.msra.mxu0 %v84
    %255 = vmatprep.subr.mxu0 0.0
    %256 = vmatpush1.msra.mxu0 %v85
    %257 = vmatprep.subr.mxu0 0.0
    %258 = vmatpush1.msra.mxu0 %v86
    %259 = vmatprep.subr.mxu0 0.0
    %260 = vmatpush1.msra.mxu0 %v87
    %261 = vmatprep.subr.mxu0 0.0
    %262 = vmatpush1.msra.mxu0 %v88
    %263 = vmatprep.subr.mxu0 0.0
    %264 = vmatpush1.msra.mxu0 %v89
    %265 = vmatprep.subr.mxu0 0.0
    %266 = vmatpush1.msra.mxu0 %v90
    %267 = vmatprep.subr.mxu0 0.0
    %268 = vmatpush1.msra.mxu0 %v91
    %269 = vmatprep.subr.mxu0 0.0
    %270 = vmatpush1.msra.mxu0 %v92
    %271 = vmatprep.subr.mxu0 0.0
    %272 = vmatpush1.msra.mxu0 %v93
    %273 = vmatprep.subr.mxu0 0.0
    %274 = vmatpush1.msra.mxu0 %v94
    %275 = vmatprep.subr.mxu0 0.0
    %276 = vmatpush1.msra.mxu0 %v95
    %277 = vmatprep.subr.mxu0 0.0
    %278 = vmatpush1.msra.mxu0 %v96
    %279 = vmatprep.subr.mxu0 0.0
    %280 = vmatpush1.msra.mxu0 %v97
    %281 = vmatprep.subr.mxu0 0.0
    %282 = vmatpush1.msra.mxu0 %v98
    %283 = vmatprep.subr.mxu0 0.0
    %284 = vmatpush1.msra.mxu0 %v99
    %285 = vmatprep.subr.mxu0 0.0
    %286 = vmatpush1.msra.mxu0 %v100
    %287 = vmatprep.subr.mxu0 0.0
    %288 = vmatpush1.msra.mxu0 %v101
    %289 = vmatprep.subr.mxu0 0.0
    %290 = vmatpush1.msra.mxu0 %v102
    %291 = vmatprep.subr.mxu0 0.0
    %292 = vmatpush1.msra.mxu0 %v103
    %293 = vmatprep.mubr.f32.mxu0 %v36
    %294 = vmatmul.mubr.f32.gmra.mrb[0].mxu0 %v35
    %v295 = vpop.f32.mrb[0].mxu0
    %v296 = vadd.f32 %v226, %v295
    %v297 = vpop.f32.mrb[0].mxu0
    %298 = vdwg.mxu0
    %299 = vmatprep.subr.mxu0 0.0
    %300 = vmatpush1.msra.mxu0 %v104
    %301 = vmatprep.subr.mxu0 0.0
    %302 = vmatpush1.msra.mxu0 %v105
    %303 = vmatprep.subr.mxu0 0.0
    %304 = vmatpush1.msra.mxu0 %v106
    %305 = vmatprep.subr.mxu0 0.0
    %306 = vmatpush1.msra.mxu0 %v107
    %307 = vmatprep.subr.mxu0 0.0
    %308 = vmatpush1.msra.mxu0 %v108
    %309 = vmatprep.subr.mxu0 0.0
    %310 = vmatpush1.msra.mxu0 %v109
    %311 = vmatprep.subr.mxu0 0.0
    %312 = vmatpush1.msra.mxu0 %v110
    %313 = vmatprep.subr.mxu0 0.0
    %314 = vmatpush1.msra.mxu0 %v111
    %315 = vmatprep.subr.mxu0 0.0
    %316 = vmatpush1.msra.mxu0 %v112
    %317 = vmatprep.subr.mxu0 0.0
    %318 = vmatpush1.msra.mxu0 %v113
    %319 = vmatprep.subr.mxu0 0.0
    %320 = vmatpush1.msra.mxu0 %v114
    %321 = vmatprep.subr.mxu0 0.0
    %322 = vmatpush1.msra.mxu0 %v115
    %323 = vmatprep.subr.mxu0 0.0
    %324 = vmatpush1.msra.mxu0 %v116
    %325 = vmatprep.subr.mxu0 0.0
    %326 = vmatpush1.msra.mxu0 %v117
    %327 = vmatprep.subr.mxu0 0.0
    %328 = vmatpush1.msra.mxu0 %v118
    %329 = vmatprep.subr.mxu0 0.0
    %330 = vmatpush1.msra.mxu0 %v119
    %331 = vmatprep.subr.mxu0 0.0
    %332 = vmatpush1.msra.mxu0 %v120
    %333 = vmatprep.subr.mxu0 0.0
    %334 = vmatpush1.msra.mxu0 %v121
    %335 = vmatprep.subr.mxu0 0.0
    %336 = vmatpush1.msra.mxu0 %v122
    %337 = vmatprep.subr.mxu0 0.0
    %338 = vmatpush1.msra.mxu0 %v123
    %339 = vmatprep.subr.mxu0 0.0
    %340 = vmatpush1.msra.mxu0 %v124
    %341 = vmatprep.subr.mxu0 0.0
    %342 = vmatpush1.msra.mxu0 %v125
    %343 = vmatprep.subr.mxu0 0.0
    %344 = vmatpush1.msra.mxu0 %v126
    %345 = vmatprep.subr.mxu0 0.0
    %346 = vmatpush1.msra.mxu0 %v127
    %347 = vmatprep.subr.mxu0 0.0
    %348 = vmatpush1.msra.mxu0 %v128
    %349 = vmatprep.subr.mxu0 0.0
    %350 = vmatpush1.msra.mxu0 %v129
    %351 = vmatprep.subr.mxu0 0.0
    %352 = vmatpush1.msra.mxu0 %v130
    %353 = vmatprep.subr.mxu0 0.0
    %354 = vmatpush1.msra.mxu0 %v131
    %355 = vmatprep.subr.mxu0 0.0
    %356 = vmatpush1.msra.mxu0 %v132
    %357 = vmatprep.subr.mxu0 0.0
    %358 = vmatpush1.msra.mxu0 %v133
    %359 = vmatprep.subr.mxu0 0.0
    %360 = vmatpush1.msra.mxu0 %v134
    %361 = vmatprep.subr.mxu0 0.0
    %362 = vmatpush1.msra.mxu0 %v135
    %363 = vmatprep.mubr.f32.mxu0 %v38
    %364 = vmatmul.mubr.f32.gmra.mrb[0].mxu0 %v37
    %v365 = vpop.f32.mrb[0].mxu0
    %v366 = vadd.f32 %v296, %v365
    %v367 = vpop.f32.mrb[0].mxu0
    %368 = vdwg.mxu0
    %369 = vmatprep.subr.mxu0 0.0
    %370 = vmatpush1.msra.mxu0 %v136
    %371 = vmatprep.subr.mxu0 0.0
    %372 = vmatpush1.msra.mxu0 %v137
    %373 = vmatprep.subr.mxu0 0.0
    %374 = vmatpush1.msra.mxu0 %v138
    %375 = vmatprep.subr.mxu0 0.0
    %376 = vmatpush1.msra.mxu0 %v139
    %377 = vmatprep.subr.mxu0 0.0
    %378 = vmatpush1.msra.mxu0 %v140
    %379 = vmatprep.subr.mxu0 0.0
    %380 = vmatpush1.msra.mxu0 %v141
    %381 = vmatprep.subr.mxu0 0.0
    %382 = vmatpush1.msra.mxu0 %v142
    %383 = vmatprep.subr.mxu0 0.0
    %384 = vmatpush1.msra.mxu0 %v143
    %385 = vmatprep.subr.mxu0 0.0
    %386 = vmatpush1.msra.mxu0 %v144
    %387 = vmatprep.subr.mxu0 0.0
    %388 = vmatpush1.msra.mxu0 %v145
    %389 = vmatprep.subr.mxu0 0.0
    %390 = vmatpush1.msra.mxu0 %v146
    %391 = vmatprep.subr.mxu0 0.0
    %392 = vmatpush1.msra.mxu0 %v147
    %393 = vmatprep.subr.mxu0 0.0
    %394 = vmatpush1.msra.mxu0 %v148
    %395 = vmatprep.subr.mxu0 0.0
    %396 = vmatpush1.msra.mxu0 %v149
    %397 = vmatprep.subr.mxu0 0.0
    %398 = vmatpush1.msra.mxu0 %v150
    %399 = vmatprep.subr.mxu0 0.0
    %400 = vmatpush1.msra.mxu0 %v151
    %401 = vmatprep.subr.mxu0 0.0
    %402 = vmatpush1.msra.mxu0 0.0
    %403 = vmatprep.subr.mxu0 0.0
    %404 = vmatpush1.msra.mxu0 0.0
    %405 = vmatprep.subr.mxu0 0.0
    %406 = vmatpush1.msra.mxu0 0.0
    %407 = vmatprep.subr.mxu0 0.0
    %408 = vmatpush1.msra.mxu0 0.0
    %409 = vmatprep.subr.mxu0 0.0
    %410 = vmatpush1.msra.mxu0 0.0
    %411 = vmatprep.subr.mxu0 0.0
    %412 = vmatpush1.msra.mxu0 0.0
    %413 = vmatprep.subr.mxu0 0.0
    %414 = vmatpush1.msra.mxu0 0.0
    %415 = vmatprep.subr.mxu0 0.0
    %416 = vmatpush1.msra.mxu0 0.0
    %417 = vmatprep.subr.mxu0 0.0
    %418 = vmatpush1.msra.mxu0 0.0
    %419 = vmatprep.subr.mxu0 0.0
    %420 = vmatpush1.msra.mxu0 0.0
    %421 = vmatprep.subr.mxu0 0.0
    %422 = vmatpush1.msra.mxu0 0.0
    %423 = vmatprep.subr.mxu0 0.0
    %424 = vmatpush1.msra.mxu0 0.0
    %425 = vmatprep.subr.mxu0 0.0
    %426 = vmatpush1.msra.mxu0 0.0
    %427 = vmatprep.subr.mxu0 0.0
    %428 = vmatpush1.msra.mxu0 0.0
    %429 = vmatprep.subr.mxu0 0.0
    %430 = vmatpush1.msra.mxu0 0.0
    %431 = vmatprep.subr.mxu0 0.0
    %432 = vmatpush1.msra.mxu0 0.0
    %433 = vmatprep.mubr.f32.mxu0 0.0
    %434 = vmatmul.mubr.f32.gmra.mrb[0].mxu0 %v39
    %v435 = vpop.f32.mrb[0].mxu0
    %v436 = vadd.f32 %v366, %v435
    %v437 = vpop.f32.mrb[0].mxu0
    %438 = vdwg.mxu0
    %v439 = vmax.f32 %v436, 0.0
    %v440 = vld [vmem:[%s3] sm:$0xff]
    %v441 = vld [vmem:[%s3 + $0x8] sm:$0xff]
    %v442 = vld [vmem:[%s3 + $0x10] sm:$0xff]
    %v443 = vld [vmem:[%s3 + $0x18] sm:$0xff]
    %v444 = vld [vmem:[%s3 + $0x20] sm:$0xff]
    %v445 = vld [vmem:[%s3 + $0x28] sm:$0xff]
    %v446 = vld [vmem:[%s3 + $0x30] sm:$0xff]
    %v447 = vld [vmem:[%s3 + $0x38] sm:$0xff]
    %v448 = vld [vmem:[%s3 + $0x40] sm:$0xff]
    %v449 = vld [vmem:[%s3 + $0x48] sm:$0xff]
    %v450 = vld [vmem:[%s3 + $0x50] sm:$0xff]
    %v451 = vld [vmem:[%s3 + $0x58] sm:$0xff]
    %v452 = vld [vmem:[%s3 + $0x60] sm:$0xff]
    %v453 = vld [vmem:[%s3 + $0x68] sm:$0xff]
    %v454 = vld [vmem:[%s3 + $0x70] sm:$0xff]
    %v455 = vld [vmem:[%s3 + $0x78] sm:$0xff]
    %v456 = vld [vmem:[%s4] sm:$0x1]
    %v458 = vlaneseq
    %v459 = vshrl.u32 %v458, 7
    %v460 = vsub.s32 0, %v459
    %v461 = vrot.slane %v456, %v460
    %463 = vmatprep.subr.mxu0 0.0
    %464 = vmatpush1.msra.mxu0 %v440
    %465 = vmatprep.subr.mxu0 0.0
    %466 = vmatpush1.msra.mxu0 %v441
    %467 = vmatprep.subr.mxu0 0.0
    %468 = vmatpush1.msra.mxu0 %v442
    %469 = vmatprep.subr.mxu0 0.0
    %470 = vmatpush1.msra.mxu0 %v443
    %471 = vmatprep.subr.mxu0 0.0
    %472 = vmatpush1.msra.mxu0 %v444
    %473 = vmatprep.subr.mxu0 0.0
    %474 = vmatpush1.msra.mxu0 %v445
    %475 = vmatprep.subr.mxu0 0.0
    %476 = vmatpush1.msra.mxu0 %v446
    %477 = vmatprep.subr.mxu0 0.0
    %478 = vmatpush1.msra.mxu0 %v447
    %479 = vmatprep.subr.mxu0 0.0
    %480 = vmatpush1.msra.mxu0 %v448
    %481 = vmatprep.subr.mxu0 0.0
    %482 = vmatpush1.msra.mxu0 %v449
    %483 = vmatprep.subr.mxu0 0.0
    %484 = vmatpush1.msra.mxu0 %v450
    %485 = vmatprep.subr.mxu0 0.0
    %486 = vmatpush1.msra.mxu0 %v451
    %487 = vmatprep.subr.mxu0 0.0
    %488 = vmatpush1.msra.mxu0 %v452
    %489 = vmatprep.subr.mxu0 0.0
    %490 = vmatpush1.msra.mxu0 %v453
    %491 = vmatprep.subr.mxu0 0.0
    %492 = vmatpush1.msra.mxu0 %v454
    %493 = vmatprep.subr.mxu0 0.0
    %494 = vmatpush1.msra.mxu0 %v455
    %495 = vmatprep.subr.mxu0 0.0
    %496 = vmatpush1.msra.mxu0 0.0
    %497 = vmatprep.subr.mxu0 0.0
    %498 = vmatpush1.msra.mxu0 0.0
    %499 = vmatprep.subr.mxu0 0.0
    %500 = vmatpush1.msra.mxu0 0.0
    %501 = vmatprep.subr.mxu0 0.0
    %502 = vmatpush1.msra.mxu0 0.0
    %503 = vmatprep.subr.mxu0 0.0
    %504 = vmatpush1.msra.mxu0 0.0
    %505 = vmatprep.subr.mxu0 0.0
    %506 = vmatpush1.msra.mxu0 0.0
    %507 = vmatprep.subr.mxu0 0.0
    %508 = vmatpush1.msra.mxu0 0.0
    %509 = vmatprep.subr.mxu0 0.0
    %510 = vmatpush1.msra.mxu0 0.0
    %511 = vmatprep.subr.mxu0 0.0
    %512 = vmatpush1.msra.mxu0 0.0
    %513 = vmatprep.subr.mxu0 0.0
    %514 = vmatpush1.msra.mxu0 0.0
    %515 = vmatprep.subr.mxu0 0.0
    %516 = vmatpush1.msra.mxu0 0.0
    %517 = vmatprep.subr.mxu0 0.0
    %518 = vmatpush1.msra.mxu0 0.0
    %519 = vmatprep.subr.mxu0 0.0
    %520 = vmatpush1.msra.mxu0 0.0
    %521 = vmatprep.subr.mxu0 0.0
    %522 = vmatpush1.msra.mxu0 0.0
    %523 = vmatprep.subr.mxu0 0.0
    %524 = vmatpush1.msra.mxu0 0.0
    %525 = vmatprep.subr.mxu0 0.0
    %526 = vmatpush1.msra.mxu0 0.0
    %527 = vmatprep.mubr.f32.mxu0 0.0
    %528 = vmatmul.mubr.f32.gmra.mrb[0].mxu0 %v439
    %v529 = vpop.f32.mrb[0].mxu0
    %v530 = vadd.f32 %v461, %v529
    %v531 = vpop.f32.mrb[0].mxu0
    %532 = vdwg.mxu0
    %v533 = vmax.f32 %v530, 0.0
    %v534 = vld [vmem:[%s5] sm:$0xff]
    %v535 = vld [vmem:[%s5 + $0x8] sm:$0xff]
    %v536 = vld [vmem:[%s5 + $0x10] sm:$0xff]
    %v537 = vld [vmem:[%s5 + $0x18] sm:$0xff]
    %v538 = vld [vmem:[%s5 + $0x20] sm:$0xff]
    %v539 = vld [vmem:[%s5 + $0x28] sm:$0xff]
    %v540 = vld [vmem:[%s5 + $0x30] sm:$0xff]
    %v541 = vld [vmem:[%s5 + $0x38] sm:$0xff]
    %v542 = vld [vmem:[%s5 + $0x40] sm:$0xff]
    %v543 = vld [vmem:[%s5 + $0x48] sm:$0xff]
    %v544 = vld [vmem:[%s5 + $0x50] sm:$0xff]
    %v545 = vld [vmem:[%s5 + $0x58] sm:$0xff]
    %v546 = vld [vmem:[%s5 + $0x60] sm:$0xff]
    %v547 = vld [vmem:[%s5 + $0x68] sm:$0xff]
    %v548 = vld [vmem:[%s5 + $0x70] sm:$0xff]
    %v549 = vld [vmem:[%s5 + $0x78] sm:$0xff]
    %v550 = vld [vmem:[%s6] sm:$0x1]
    %v552 = vlaneseq
    %v553 = vshrl.u32 %v552, 7
    %v554 = vsub.s32 0, %v553
    %v555 = vrot.slane %v550, %v554
    %557 = vmatprep.subr.mxu0 0.0
    %558 = vmatpush1.msra.mxu0 %v534
    %559 = vmatprep.subr.mxu0 0.0
    %560 = vmatpush1.msra.mxu0 %v535
    %561 = vmatprep.subr.mxu0 0.0
    %562 = vmatpush1.msra.mxu0 %v536
    %563 = vmatprep.subr.mxu0 0.0
    %564 = vmatpush1.msra.mxu0 %v537
    %565 = vmatprep.subr.mxu0 0.0
    %566 = vmatpush1.msra.mxu0 %v538
    %567 = vmatprep.subr.mxu0 0.0
    %568 = vmatpush1.msra.mxu0 %v539
    %569 = vmatprep.subr.mxu0 0.0
    %570 = vmatpush1.msra.mxu0 %v540
    %571 = vmatprep.subr.mxu0 0.0
    %572 = vmatpush1.msra.mxu0 %v541
    %573 = vmatprep.subr.mxu0 0.0
    %574 = vmatpush1.msra.mxu0 %v542
    %575 = vmatprep.subr.mxu0 0.0
    %576 = vmatpush1.msra.mxu0 %v543
    %577 = vmatprep.subr.mxu0 0.0
    %578 = vmatpush1.msra.mxu0 %v544
    %579 = vmatprep.subr.mxu0 0.0
    %580 = vmatpush1.msra.mxu0 %v545
    %581 = vmatprep.subr.mxu0 0.0
    %582 = vmatpush1.msra.mxu0 %v546
    %583 = vmatprep.subr.mxu0 0.0
    %584 = vmatpush1.msra.mxu0 %v547
    %585 = vmatprep.subr.mxu0 0.0
    %586 = vmatpush1.msra.mxu0 %v548
    %587 = vmatprep.subr.mxu0 0.0
    %588 = vmatpush1.msra.mxu0 %v549
    %589 = vmatprep.subr.mxu0 0.0
    %590 = vmatpush1.msra.mxu0 0.0
    %591 = vmatprep.subr.mxu0 0.0
    %592 = vmatpush1.msra.mxu0 0.0
    %593 = vmatprep.subr.mxu0 0.0
    %594 = vmatpush1.msra.mxu0 0.0
    %595 = vmatprep.subr.mxu0 0.0
    %596 = vmatpush1.msra.mxu0 0.0
    %597 = vmatprep.subr.mxu0 0.0
    %598 = vmatpush1.msra.mxu0 0.0
    %599 = vmatprep.subr.mxu0 0.0
    %600 = vmatpush1.msra.mxu0 0.0
    %601 = vmatprep.subr.mxu0 0.0
    %602 = vmatpush1.msra.mxu0 0.0
    %603 = vmatprep.subr.mxu0 0.0
    %604 = vmatpush1.msra.mxu0 0.0
    %605 = vmatprep.subr.mxu0 0.0
    %606 = vmatpush1.msra.mxu0 0.0
    %607 = vmatprep.subr.mxu0 0.0
    %608 = vmatpush1.msra.mxu0 0.0
    %609 = vmatprep.subr.mxu0 0.0
    %610 = vmatpush1.msra.mxu0 0.0
    %611 = vmatprep.subr.mxu0 0.0
    %612 = vmatpush1.msra.mxu0 0.0
    %613 = vmatprep.subr.mxu0 0.0
    %614 = vmatpush1.msra.mxu0 0.0
    %615 = vmatprep.subr.mxu0 0.0
    %616 = vmatpush1.msra.mxu0 0.0
    %617 = vmatprep.subr.mxu0 0.0
    %618 = vmatpush1.msra.mxu0 0.0
    %619 = vmatprep.subr.mxu0 0.0
    %620 = vmatpush1.msra.mxu0 0.0
    %621 = vmatprep.mubr.f32.mxu0 0.0
    %622 = vmatmul.mubr.f32.gmra.mrb[0].mxu0 %v533
    %v623 = vpop.f32.mrb[0].mxu0
    %v624 = vadd.f32 %v555, %v623
    %v625 = vpop.f32.mrb[0].mxu0
    %626 = vdwg.mxu0
    %v627 = vmax.f32 %v624, 0.0
    %v628 = vld [vmem:[%s7] sm:$0xff]
    %v629 = vld [vmem:[%s7 + $0x8] sm:$0xff]
    %v630 = vld [vmem:[%s7 + $0x10] sm:$0xff]
    %v631 = vld [vmem:[%s7 + $0x18] sm:$0xff]
    %v632 = vld [vmem:[%s7 + $0x20] sm:$0xff]
    %v633 = vld [vmem:[%s7 + $0x28] sm:$0xff]
    %v634 = vld [vmem:[%s7 + $0x30] sm:$0xff]
    %v635 = vld [vmem:[%s7 + $0x38] sm:$0xff]
    %v636 = vld [vmem:[%s7 + $0x40] sm:$0xff]
    %v637 = vld [vmem:[%s7 + $0x48] sm:$0xff]
    %v638 = vld [vmem:[%s7 + $0x50] sm:$0xff]
    %v639 = vld [vmem:[%s7 + $0x58] sm:$0xff]
    %v640 = vld [vmem:[%s7 + $0x60] sm:$0xff]
    %v641 = vld [vmem:[%s7 + $0x68] sm:$0xff]
    %v642 = vld [vmem:[%s7 + $0x70] sm:$0xff]
    %v643 = vld [vmem:[%s7 + $0x78] sm:$0xff]
    %v644 = vld [vmem:[%s8] sm:$0x1]
    %v646 = vlaneseq
    %v647 = vshrl.u32 %v646, 7
    %v648 = vsub.s32 0, %v647
    %v649 = vrot.slane %v644, %v648
    %651 = vmatprep.subr.mxu0 0.0
    %652 = vmatpush1.msra.mxu0 %v628
    %653 = vmatprep.subr.mxu0 0.0
    %654 = vmatpush1.msra.mxu0 %v629
    %655 = vmatprep.subr.mxu0 0.0
    %656 = vmatpush1.msra.mxu0 %v630
    %657 = vmatprep.subr.mxu0 0.0
    %658 = vmatpush1.msra.mxu0 %v631
    %659 = vmatprep.subr.mxu0 0.0
    %660 = vmatpush1.msra.mxu0 %v632
    %661 = vmatprep.subr.mxu0 0.0
    %662 = vmatpush1.msra.mxu0 %v633
    %663 = vmatprep.subr.mxu0 0.0
    %664 = vmatpush1.msra.mxu0 %v634
    %665 = vmatprep.subr.mxu0 0.0
    %666 = vmatpush1.msra.mxu0 %v635
    %667 = vmatprep.subr.mxu0 0.0
    %668 = vmatpush1.msra.mxu0 %v636
    %669 = vmatprep.subr.mxu0 0.0
    %670 = vmatpush1.msra.mxu0 %v637
    %671 = vmatprep.subr.mxu0 0.0
    %672 = vmatpush1.msra.mxu0 %v638
    %673 = vmatprep.subr.mxu0 0.0
    %674 = vmatpush1.msra.mxu0 %v639
    %675 = vmatprep.subr.mxu0 0.0
    %676 = vmatpush1.msra.mxu0 %v640
    %677 = vmatprep.subr.mxu0 0.0
    %678 = vmatpush1.msra.mxu0 %v641
    %679 = vmatprep.subr.mxu0 0.0
    %680 = vmatpush1.msra.mxu0 %v642
    %681 = vmatprep.subr.mxu0 0.0
    %682 = vmatpush1.msra.mxu0 %v643
    %683 = vmatprep.subr.mxu0 0.0
    %684 = vmatpush1.msra.mxu0 0.0
    %685 = vmatprep.subr.mxu0 0.0
    %686 = vmatpush1.msra.mxu0 0.0
    %687 = vmatprep.subr.mxu0 0.0
    %688 = vmatpush1.msra.mxu0 0.0
    %689 = vmatprep.subr.mxu0 0.0
    %690 = vmatpush1.msra.mxu0 0.0
    %691 = vmatprep.subr.mxu0 0.0
    %692 = vmatpush1.msra.mxu0 0.0
    %693 = vmatprep.subr.mxu0 0.0
    %694 = vmatpush1.msra.mxu0 0.0
    %695 = vmatprep.subr.mxu0 0.0
    %696 = vmatpush1.msra.mxu0 0.0
    %697 = vmatprep.subr.mxu0 0.0
    %698 = vmatpush1.msra.mxu0 0.0
    %699 = vmatprep.subr.mxu0 0.0
    %700 = vmatpush1.msra.mxu0 0.0
    %701 = vmatprep.subr.mxu0 0.0
    %702 = vmatpush1.msra.mxu0 0.0
    %703 = vmatprep.subr.mxu0 0.0
    %704 = vmatpush1.msra.mxu0 0.0
    %705 = vmatprep.subr.mxu0 0.0
    %706 = vmatpush1.msra.mxu0 0.0
    %707 = vmatprep.subr.mxu0 0.0
    %708 = vmatpush1.msra.mxu0 0.0
    %709 = vmatprep.subr.mxu0 0.0
    %710 = vmatpush1.msra.mxu0 0.0
    %711 = vmatprep.subr.mxu0 0.0
    %712 = vmatpush1.msra.mxu0 0.0
    %713 = vmatprep.subr.mxu0 0.0
    %714 = vmatpush1.msra.mxu0 0.0
    %715 = vmatprep.mubr.f32.mxu0 0.0
    %716 = vmatmul.mubr.f32.gmra.mrb[0].mxu0 %v627
    %v717 = vpop.f32.mrb[0].mxu0
    %v718 = vadd.f32 %v649, %v717
    %v719 = vpop.f32.mrb[0].mxu0
    %720 = vdwg.mxu0
    %721 = vst [vmem:[#allocation2] sm:$0xff] %v718
    // Predicated region
    $region38: #{net_forward.1} parent=1 // pred_check
      _
    $region39: #{net_forward.1} parent=1 // pred_check_branch
      %723 = sbr.rel (0) target = $region41
    $region40: #{net_forward.1} parent=1 // pred_region
      %s725 = ssub.s32 128, 128
      %726 = vsyncadd [#allocation3], %s725
      %s728 = sshll.u32 [#allocation2], 4
      %s729 = int_to_ptr.vmem [resolvable:$true] %s728
      %731 = dma.vmem_to_hbm [thread:$0]  %s729, 128, %s9, [#allocation3]
    $region41: #{net_forward.1} parent=1 // pred_fallthru
      _
    // Predicated region
    $region42: #{net_forward.1} parent=1 // pred_check
      _
    $region43: #{net_forward.1} parent=1 // pred_check_branch
      %733 = sbr.rel (0) target = $region45
    $region44: #{net_forward.1} parent=1 // pred_region
      %734 = dma.done [#allocation3], 128
    $region45: #{net_forward.1} parent=1 // pred_fallthru
      _
    %735 = vsyncpa [#allocation3], 1

</llo_original>
